<compile_context>
chip_gen: v7x
topology: tpu7x:2x2x1
jax: 0.10.0
libtpu: 0.0.40
codegen_flags: <defaults>
</compile_context>

<pallas_src>
import functools

import jax
import jax.numpy as jnp
from jax.experimental import pallas as pl
from jax.experimental.pallas import tpu as pltpu


def _erf(x):
    """erf via the Abramowitz & Stegun 7.1.26 rational approximation.

    |abs error| <= 1.5e-7 (at f32 resolution for this use, far below the bf16
    matmul noise already present).  Built only from exp / mul / add / div /
    where so it always lowers in Mosaic.
    TODO(synk): switch to jax.lax.erf once its Pallas-TPU lowering is confirmed
    in the target JAX build.
    """
    p = 0.3275911
    a1, a2, a3, a4, a5 = (0.254829592, -0.284496736, 1.421413741,
                          -1.453152027, 1.061405429)
    ax = jnp.abs(x)
    t = 1.0 / (1.0 + p * ax)
    poly = ((((a5 * t + a4) * t + a3) * t + a2) * t + a1) * t
    y = 1.0 - poly * jnp.exp(-ax * ax)
    return jnp.where(x < 0.0, -y, y)


def _ntxent_kernel(zis_ref, zjs_ref, w1_ref, w2_ref, out_ref, *, inv_temp):
    _, batch, d = zis_ref.shape
    inv_sqrt2 = 0.7071067811865476

    # Stack the two views in-kernel (VMEM copy) instead of in the wrapper.
    z = jnp.concatenate([zis_ref[0], zjs_ref[0]], axis=0)             # (2B, D) f32

    # ---- fused 2-layer MLP over the stacked batch (bf16 MXU, f32 accum) ----
    # Bias = last row of the pre-cast bf16 augmented weight; added in f32.
    w1a = w1_ref[...]                                                 # (D+1, H1) bf16
    h = jnp.dot(z.astype(jnp.bfloat16), w1a[:d, :],
                preferred_element_type=jnp.float32)
    h = h + w1a[d:, :].astype(jnp.float32)                            # (2B, H1)
    # torch nn.GELU() default = exact erf formulation, evaluated in f32.
    h = 0.5 * h * (1.0 + _erf(h * inv_sqrt2))

    w2a = w2_ref[...]                                                 # (H1+1, H2) bf16
    h1 = w2a.shape[0] - 1
    f = jnp.dot(h.astype(jnp.bfloat16), w2a[:h1, :],
                preferred_element_type=jnp.float32)
    f = f + w2a[h1:, :].astype(jnp.float32)                           # (2B, H2)

    # ---- L2 normalize (F.normalize p=2, dim=-1, eps=1e-12), f32 ----
    norm = jnp.sqrt(jnp.sum(f * f, axis=-1, keepdims=True))
    f_n = f / jnp.maximum(norm, 1e-12)

    fi_n = f_n[:batch, :]                                             # (B, H2)
    fj_n = f_n[batch:, :]                                             # (B, H2)

    # ---- positives: diag(sim) computed directly as the rowwise dot, f32 ----
    pos = jnp.sum(fi_n * fj_n, axis=-1, keepdims=True) * inv_temp     # (B, 1)

    # ---- similarity matrix: contract last dims (no transpose), f32 ----
    sim = jax.lax.dot_general(fi_n, fj_n,
                              dimension_numbers=(((1,), (1,)), ((), ())),
                              preferred_element_type=jnp.float32)     # (B, B)

    row = jax.lax.broadcasted_iota(jnp.int32, (batch, batch), 0)
    col = jax.lax.broadcasted_iota(jnp.int32, (batch, batch), 1)
    diag = row == col

    # Single (B,B) exp; negatives = off-diagonal entries / T.
    # No max-subtraction: |sim| <= 1 for normalized features, so exp is safe
    # for any temperature >= ~0.012.
    e = jnp.exp(sim * inv_temp)
    neg_sum = jnp.sum(jnp.where(diag, 0.0, e), axis=1, keepdims=True)  # (B, 1)

    # Reproduce the torch keepdim-broadcast quirk EXACTLY:
    #   loss[i, j] = log(exp(pos[j]) + neg_sum[i]) - pos[j]
    # pos_row[0, j] == pos[j] via a masked transpose of the positives column.
    pos_row = jnp.sum(jnp.where(diag, pos, 0.0), axis=0, keepdims=True)  # (1, B)
    loss_mat = jnp.log(jnp.exp(pos_row) + neg_sum) - pos_row             # (B, B)
    loss = jnp.sum(loss_mat) * (1.0 / batch)

    # Full-vreg (1, 8, 128) output block: unmasked store, distinct block per
    # grid step so the pair axis can be sharded PARALLEL (v7x 2 TCs) without
    # write-back races.  Wrapper reads [:, 0, 0].
    out_ref[...] = jnp.full(out_ref.shape, loss, dtype=jnp.float32)


@functools.partial(jax.jit, static_argnames=("temperature",))
def ntxent_loss(zis, zjs, w1_aug, w2_aug, *, temperature):
    """NT-Xent loss. zis/zjs: (B, D) for one pair, or (N, B, D) for N pairs
    evaluated with a single dispatch and a PARALLEL pair grid axis."""
    single = zis.ndim == 2
    if single:
        zis, zjs = zis[None], zjs[None]
    n, b, d = zis.shape
    h1 = w1_aug.shape[1]
    h2 = w2_aug.shape[1]

    kernel = functools.partial(_ntxent_kernel, inv_temp=1.0 / float(temperature))

    flops = n * (2 * (2 * b) * d * h1 + 2 * (2 * b) * h1 * h2
                 + 2 * b * b * h2 + 32 * b * b)
    transcendentals = n * (2 * (2 * b) * h1 + 2 * b * b + 4 * b)
    bytes_accessed = (n * (2 * b * d + 8 * 128) * 4
                      + (w1_aug.size + w2_aug.size) * 2)

    out = pl.pallas_call(
        kernel,
        grid=(n,),
        in_specs=[
            pl.BlockSpec((1, b, d), lambda i: (i, 0, 0)),
            pl.BlockSpec((1, b, d), lambda i: (i, 0, 0)),
            pl.BlockSpec((d + 1, h1), lambda i: (0, 0)),   # weights resident
            pl.BlockSpec((h1 + 1, h2), lambda i: (0, 0)),  # across grid steps
        ],
        out_specs=pl.BlockSpec((1, 8, 128), lambda i: (i, 0, 0)),
        out_shape=jax.ShapeDtypeStruct((n, 8, 128), jnp.float32),
        compiler_params=pltpu.CompilerParams(
            dimension_semantics=(pltpu.PARALLEL,)),
        cost_estimate=pl.CostEstimate(flops=int(flops),
                                      transcendentals=int(transcendentals),
                                      bytes_accessed=int(bytes_accessed)),
    )(zis, zjs, w1_aug, w2_aug)

    losses = out[:, 0, 0]
    return losses[0] if single else losses


def init_params(key, module_dim):
    """Deterministic init matching torch.nn.Linear default (U(-1/sqrt(fan_in), +))."""
    h1 = module_dim // 4
    h2 = module_dim // 8
    k1, k2, k3, k4 = jax.random.split(key, 4)
    bnd = 1.0 / jnp.sqrt(module_dim)
    w1 = jax.random.uniform(k1, (module_dim, h1), jnp.float32, -bnd, bnd)
    b1 = jax.random.uniform(k2, (1, h1), jnp.float32, -bnd, bnd)
    bnd = 1.0 / jnp.sqrt(h1)
    w2 = jax.random.uniform(k3, (h1, h2), jnp.float32, -bnd, bnd)
    b2 = jax.random.uniform(k4, (1, h2), jnp.float32, -bnd, bnd)
    return w1, b1, w2, b2


def pack_params(w1, b1, w2, b2):
    """Fold each bias as the last row of its weight and pre-cast to bf16 once
    (outside the hot path): kernel then takes 2 constant operands, no per-call
    casts, and two fewer tiny input DMAs."""
    w1_aug = jnp.concatenate([w1, b1], axis=0).astype(jnp.bfloat16)   # (D+1, H1)
    w2_aug = jnp.concatenate([w2, b2], axis=0).astype(jnp.bfloat16)   # (H1+1, H2)
    return w1_aug, w2_aug


if __name__ == "__main__":
    module_dim = 32
    batch = 8
    temperature = 0.5

    key = jax.random.PRNGKey(0)
    k_zis, k_zjs, k_params = jax.random.split(key, 3)
    zis = jax.random.normal(k_zis, (batch, module_dim), jnp.float32)
    zjs = jax.random.normal(k_zjs, (batch, module_dim), jnp.float32)
    w1, b1, w2, b2 = init_params(k_params, module_dim)
    w1_aug, w2_aug = pack_params(w1, b1, w2, b2)

    # Single (zis, zjs) pair -- matches the torch module's forward().
    loss = ntxent_loss(zis, zjs, w1_aug, w2_aug, temperature=temperature)
    jax.block_until_ready(loss)

    # Batched pairs: one dispatch, leading PARALLEL grid axis (2x on v7x).
    zis_b = jax.random.normal(k_zis, (4, batch, module_dim), jnp.float32)
    zjs_b = jax.random.normal(k_zjs, (4, batch, module_dim), jnp.float32)
    losses = ntxent_loss(zis_b, zjs_b, w1_aug, w2_aug, temperature=temperature)
    jax.block_until_ready(losses)

    print("KERNEL_OK")
</pallas_src>

<mosaic_0001>
module attributes {stable_mosaic.version = 11 : i64} {
  func.func @_ntxent_kernel(%arg0: i32, %arg1: memref<1x8x32xf32, #tpu.memory_space<vmem>>, %arg2: memref<1x8x32xf32, #tpu.memory_space<vmem>>, %arg3: memref<33x8xbf16, #tpu.memory_space<vmem>>, %arg4: memref<9x4xbf16, #tpu.memory_space<vmem>>, %arg5: memref<1x8x128xf32, #tpu.memory_space<vmem>>) attributes {dimension_semantics = [#tpu.dimension_semantics<parallel>], iteration_bounds = array<i64: 1>, scalar_prefetch = 0 : i64, scratch_operands = 0 : i64, tpu.core_type = #tpu.core_type<tc>, window_params = [{transform_indices = @transform_0, window_bounds = array<i64: 1, 8, 32>}, {transform_indices = @transform_1, window_bounds = array<i64: 1, 8, 32>}, {pipeline_mode = #tpu.pipeline_mode<synchronous>, transform_indices = @transform_2, window_bounds = array<i64: 33, 8>}, {pipeline_mode = #tpu.pipeline_mode<synchronous>, transform_indices = @transform_3, window_bounds = array<i64: 9, 4>}, {transform_indices = @transform_4, window_bounds = array<i64: 1, 8, 128>}]} {
    %c0 = arith.constant 0 : index
    %c0_0 = arith.constant 0 : index
    %c0_1 = arith.constant 0 : index
    %0 = vector.load %arg1[%c0, %c0_0, %c0_1] : memref<1x8x32xf32, #tpu.memory_space<vmem>>, vector<1x8x32xf32>
    %1 = vector.shape_cast %0 : vector<1x8x32xf32> to vector<8x32xf32>
    %c0_2 = arith.constant 0 : index
    %c0_3 = arith.constant 0 : index
    %c0_4 = arith.constant 0 : index
    %2 = vector.load %arg2[%c0_2, %c0_3, %c0_4] : memref<1x8x32xf32, #tpu.memory_space<vmem>>, vector<1x8x32xf32>
    %3 = vector.shape_cast %2 : vector<1x8x32xf32> to vector<8x32xf32>
    %4 = tpu.concatenate %1, %3 in 0 : vector<8x32xf32>, vector<8x32xf32> -> vector<16x32xf32>
    %c0_5 = arith.constant 0 : index
    %c0_6 = arith.constant 0 : index
    %5 = vector.load %arg3[%c0_5, %c0_6] : memref<33x8xbf16, #tpu.memory_space<vmem>>, vector<33x8xbf16>
    %6 = arith.truncf %4 : vector<16x32xf32> to vector<16x32xbf16>
    %7 = vector.extract_strided_slice %5 {offsets = [0, 0], sizes = [32, 8], strides = [1, 1]} : vector<33x8xbf16> to vector<32x8xbf16>
    %cst = arith.constant dense<0.000000e+00> : vector<16x8xf32>
    %8 = tpu.matmul %6, %7, %cst {dimension_numbers = #tpu.dot_dimension_numbers<[1], [0], [0], [1], [0, 0, 1, 1], [], []>} : vector<16x32xbf16>, vector<32x8xbf16>, vector<16x8xf32> -> vector<16x8xf32>
    %9 = vector.extract_strided_slice %5 {offsets = [32, 0], sizes = [1, 8], strides = [1, 1]} : vector<33x8xbf16> to vector<1x8xbf16>
    %10 = arith.extf %9 : vector<1x8xbf16> to vector<1x8xf32>
    %11 = vector.broadcast %10 : vector<1x8xf32> to vector<16x8xf32>
    %12 = arith.addf %8, %11 : vector<16x8xf32>
    %cst_7 = arith.constant 5.000000e-01 : f32
    %13 = vector.broadcast %cst_7 : f32 to vector<16x8xf32>
    %14 = arith.mulf %13, %12 : vector<16x8xf32>
    %cst_8 = arith.constant 0.707106769 : f32
    %15 = vector.broadcast %cst_8 : f32 to vector<16x8xf32>
    %16 = arith.mulf %12, %15 : vector<16x8xf32>
    %17 = math.absf %16 : vector<16x8xf32>
    %cst_9 = arith.constant 0.327591091 : f32
    %18 = vector.broadcast %cst_9 : f32 to vector<16x8xf32>
    %19 = arith.mulf %18, %17 : vector<16x8xf32>
    %cst_10 = arith.constant 1.000000e+00 : f32
    %20 = vector.broadcast %cst_10 : f32 to vector<16x8xf32>
    %21 = arith.addf %20, %19 : vector<16x8xf32>
    %cst_11 = arith.constant 1.000000e+00 : f32
    %22 = vector.broadcast %cst_11 : f32 to vector<16x8xf32>
    %23 = arith.divf %22, %21 : vector<16x8xf32>
    %cst_12 = arith.constant 1.06140542 : f32
    %24 = vector.broadcast %cst_12 : f32 to vector<16x8xf32>
    %25 = arith.mulf %24, %23 : vector<16x8xf32>
    %cst_13 = arith.constant -1.45315206 : f32
    %26 = vector.broadcast %cst_13 : f32 to vector<16x8xf32>
    %27 = arith.addf %25, %26 : vector<16x8xf32>
    %28 = arith.mulf %27, %23 : vector<16x8xf32>
    %cst_14 = arith.constant 1.42141378 : f32
    %29 = vector.broadcast %cst_14 : f32 to vector<16x8xf32>
    %30 = arith.addf %28, %29 : vector<16x8xf32>
    %31 = arith.mulf %30, %23 : vector<16x8xf32>
    %cst_15 = arith.constant -0.284496725 : f32
    %32 = vector.broadcast %cst_15 : f32 to vector<16x8xf32>
    %33 = arith.addf %31, %32 : vector<16x8xf32>
    %34 = arith.mulf %33, %23 : vector<16x8xf32>
    %cst_16 = arith.constant 0.254829586 : f32
    %35 = vector.broadcast %cst_16 : f32 to vector<16x8xf32>
    %36 = arith.addf %34, %35 : vector<16x8xf32>
    %37 = arith.mulf %36, %23 : vector<16x8xf32>
    %cst_17 = arith.constant 0.000000e+00 : f32
    %38 = vector.broadcast %cst_17 : f32 to vector<16x8xf32>
    %39 = arith.subf %38, %17 : vector<16x8xf32>
    %40 = arith.mulf %39, %17 : vector<16x8xf32>
    %41 = math.exp %40 : vector<16x8xf32>
    %42 = arith.mulf %37, %41 : vector<16x8xf32>
    %cst_18 = arith.constant 1.000000e+00 : f32
    %43 = vector.broadcast %cst_18 : f32 to vector<16x8xf32>
    %44 = arith.subf %43, %42 : vector<16x8xf32>
    %cst_19 = arith.constant 0.000000e+00 : f32
    %45 = vector.broadcast %cst_19 : f32 to vector<16x8xf32>
    %46 = arith.cmpf olt, %16, %45 : vector<16x8xf32>
    %cst_20 = arith.constant 0.000000e+00 : f32
    %47 = vector.broadcast %cst_20 : f32 to vector<16x8xf32>
    %48 = arith.subf %47, %44 : vector<16x8xf32>
    %49 = arith.select %46, %48, %44 : vector<16x8xi1>, vector<16x8xf32>
    %cst_21 = arith.constant 1.000000e+00 : f32
    %50 = vector.broadcast %cst_21 : f32 to vector<16x8xf32>
    %51 = arith.addf %50, %49 : vector<16x8xf32>
    %52 = arith.mulf %14, %51 : vector<16x8xf32>
    %c0_22 = arith.constant 0 : index
    %c0_23 = arith.constant 0 : index
    %53 = vector.load %arg4[%c0_22, %c0_23] : memref<9x4xbf16, #tpu.memory_space<vmem>>, vector<9x4xbf16>
    %54 = arith.truncf %52 : vector<16x8xf32> to vector<16x8xbf16>
    %55 = vector.extract_strided_slice %53 {offsets = [0, 0], sizes = [8, 4], strides = [1, 1]} : vector<9x4xbf16> to vector<8x4xbf16>
    %cst_24 = arith.constant dense<0.000000e+00> : vector<16x4xf32>
    %56 = tpu.matmul %54, %55, %cst_24 {dimension_numbers = #tpu.dot_dimension_numbers<[1], [0], [0], [1], [0, 0, 1, 1], [], []>} : vector<16x8xbf16>, vector<8x4xbf16>, vector<16x4xf32> -> vector<16x4xf32>
    %57 = vector.extract_strided_slice %53 {offsets = [8, 0], sizes = [1, 4], strides = [1, 1]} : vector<9x4xbf16> to vector<1x4xbf16>
    %58 = arith.extf %57 : vector<1x4xbf16> to vector<1x4xf32>
    %59 = vector.broadcast %58 : vector<1x4xf32> to vector<16x4xf32>
    %60 = arith.addf %56, %59 : vector<16x4xf32>
    %61 = arith.mulf %60, %60 : vector<16x4xf32>
    %cst_25 = arith.constant dense<0.000000e+00> : vector<16xf32>
    %62 = vector.multi_reduction <add>, %61, %cst_25 [1] : vector<16x4xf32> to vector<16xf32>
    %63 = vector.shape_cast %62 : vector<16xf32> to vector<16x1xf32>
    %64 = math.sqrt %63 : vector<16x1xf32>
    %cst_26 = arith.constant 9.99999996E-13 : f32
    %65 = vector.broadcast %cst_26 : f32 to vector<16x1xf32>
    %66 = arith.maximumf %64, %65 : vector<16x1xf32>
    %67 = vector.broadcast %66 : vector<16x1xf32> to vector<16x4xf32>
    %68 = arith.divf %60, %67 : vector<16x4xf32>
    %69 = vector.extract_strided_slice %68 {offsets = [0, 0], sizes = [8, 4], strides = [1, 1]} : vector<16x4xf32> to vector<8x4xf32>
    %70 = vector.extract_strided_slice %68 {offsets = [8, 0], sizes = [8, 4], strides = [1, 1]} : vector<16x4xf32> to vector<8x4xf32>
    %71 = arith.mulf %69, %70 : vector<8x4xf32>
    %cst_27 = arith.constant dense<0.000000e+00> : vector<8xf32>
    %72 = vector.multi_reduction <add>, %71, %cst_27 [1] : vector<8x4xf32> to vector<8xf32>
    %73 = vector.shape_cast %72 : vector<8xf32> to vector<8x1xf32>
    %cst_28 = arith.constant 2.000000e+00 : f32
    %74 = vector.broadcast %cst_28 : f32 to vector<8x1xf32>
    %75 = arith.mulf %73, %74 : vector<8x1xf32>
    %cst_29 = arith.constant dense<0.000000e+00> : vector<8x8xf32>
    %76 = tpu.matmul %69, %70, %cst_29 {dimension_numbers = #tpu.dot_dimension_numbers<[1], [1], [0], [0], [0, 0, 1, 0], [], []>} : vector<8x4xf32>, vector<8x4xf32>, vector<8x8xf32> -> vector<8x8xf32>
    %77 = tpu.iota {dimensions = array<i32: 0>} : vector<8x8xi32>
    %78 = tpu.iota {dimensions = array<i32: 1>} : vector<8x8xi32>
    %79 = arith.cmpi eq, %77, %78 : vector<8x8xi32>
    %cst_30 = arith.constant 2.000000e+00 : f32
    %80 = vector.broadcast %cst_30 : f32 to vector<8x8xf32>
    %81 = arith.mulf %76, %80 : vector<8x8xf32>
    %82 = math.exp %81 : vector<8x8xf32>
    %cst_31 = arith.constant 0.000000e+00 : f32
    %83 = vector.broadcast %cst_31 : f32 to vector<8x8xf32>
    %84 = arith.select %79, %83, %82 : vector<8x8xi1>, vector<8x8xf32>
    %cst_32 = arith.constant dense<0.000000e+00> : vector<8xf32>
    %85 = vector.multi_reduction <add>, %84, %cst_32 [1] : vector<8x8xf32> to vector<8xf32>
    %86 = vector.shape_cast %85 : vector<8xf32> to vector<8x1xf32>
    %cst_33 = arith.constant 0.000000e+00 : f32
    %87 = vector.shape_cast %75 : vector<8x1xf32> to vector<8x1xf32>
    %88 = vector.broadcast %87 : vector<8x1xf32> to vector<8x8xf32>
    %89 = vector.broadcast %cst_33 : f32 to vector<8x8xf32>
    %90 = arith.select %79, %88, %89 : vector<8x8xi1>, vector<8x8xf32>
    %cst_34 = arith.constant dense<0.000000e+00> : vector<8xf32>
    %91 = vector.multi_reduction <add>, %90, %cst_34 [0] : vector<8x8xf32> to vector<8xf32>
    %92 = vector.shape_cast %91 : vector<8xf32> to vector<1x8xf32>
    %93 = math.exp %92 : vector<1x8xf32>
    %94 = vector.broadcast %93 : vector<1x8xf32> to vector<8x8xf32>
    %95 = vector.broadcast %86 : vector<8x1xf32> to vector<8x8xf32>
    %96 = arith.addf %94, %95 : vector<8x8xf32>
    %97 = math.log %96 : vector<8x8xf32>
    %98 = vector.broadcast %92 : vector<1x8xf32> to vector<8x8xf32>
    %99 = arith.subf %97, %98 : vector<8x8xf32>
    %100 = vector.shape_cast %99 : vector<8x8xf32> to vector<1x8x8xf32>
    %cst_35 = arith.constant dense<0.000000e+00> : vector<1xf32>
    %101 = vector.multi_reduction <add>, %100, %cst_35 [1, 2] : vector<1x8x8xf32> to vector<1xf32>
    %102 = vector.shape_cast %101 : vector<1xf32> to vector<1x1x1xf32>
    %103 = vector.extract %102[0, 0, 0] : f32 from vector<1x1x1xf32>
    %cst_36 = arith.constant 1.250000e-01 : f32
    %104 = arith.mulf %103, %cst_36 : f32
    %105 = vector.broadcast %104 : f32 to vector<1x8x128xf32>
    %c0_37 = arith.constant 0 : index
    %c0_38 = arith.constant 0 : index
    %c0_39 = arith.constant 0 : index
    %106 = vector.load %arg5[%c0_37, %c0_38, %c0_39] : memref<1x8x128xf32, #tpu.memory_space<vmem>>, vector<1x8x128xf32>
    tpu.vector_store %arg5[%c0_37, %c0_38, %c0_39], %105 {strides = array<i32>} : memref<1x8x128xf32, #tpu.memory_space<vmem>>, vector<1x8x128xf32>,
    return
  }
  func.func @transform_0(%arg0: i32) -> (i32, i32, i32) {
    %c0_i32 = arith.constant 0 : i32
    %c0_i32_0 = arith.constant 0 : i32
    %c0_i32_1 = arith.constant 0 : i32
    return %arg0, %c0_i32, %c0_i32_0 : i32, i32, i32
  }
  func.func @transform_1(%arg0: i32) -> (i32, i32, i32) {
    %c0_i32 = arith.constant 0 : i32
    %c0_i32_0 = arith.constant 0 : i32
    %c0_i32_1 = arith.constant 0 : i32
    return %arg0, %c0_i32, %c0_i32_0 : i32, i32, i32
  }
  func.func @transform_2(%arg0: i32) -> (i32, i32) {
    %c0_i32 = arith.constant 0 : i32
    %c0_i32_0 = arith.constant 0 : i32
    %c0_i32_1 = arith.constant 0 : i32
    return %c0_i32, %c0_i32_0 : i32, i32
  }
  func.func @transform_3(%arg0: i32) -> (i32, i32) {
    %c0_i32 = arith.constant 0 : i32
    %c0_i32_0 = arith.constant 0 : i32
    %c0_i32_1 = arith.constant 0 : i32
    return %c0_i32, %c0_i32_0 : i32, i32
  }
  func.func @transform_4(%arg0: i32) -> (i32, i32, i32) {
    %c0_i32 = arith.constant 0 : i32
    %c0_i32_0 = arith.constant 0 : i32
    %c0_i32_1 = arith.constant 0 : i32
    return %arg0, %c0_i32, %c0_i32_0 : i32, i32, i32
  }
}

</mosaic_0001>

<llo_original>
// kernel: ntxent_loss.1
$region0: #{ntxent_loss.1}
  #allocation0 [shape = 'u32[]', space=smem, size = 0x4, offset = 0x4, fixed_abs, tag = 'smem constant byte address 0x4 - core index']
  #allocation1 [shape = 'u32[144,128]{1,0:T(1,128)}', space=vmem, size = 0x12000, scoped, tag = 'internal scratch']
  %s0 = inlined_call_operand.vmem [shape: f32[1,8,32], index: 0, kind: input, shape index: {}]
  %s1 = inlined_call_operand.vmem [shape: f32[1,8,32], index: 1, kind: input, shape index: {}]
  %s2 = inlined_call_operand.vmem [shape: bf16[33,8], index: 2, kind: input, shape index: {}]
  %s3 = inlined_call_operand.vmem [shape: bf16[9,4], index: 3, kind: input, shape index: {}]
  %s4 = inlined_call_operand.vmem [shape: f32[1,8,128], index: 4, kind: output, shape index: {}]
  %s5 = sld [smem:[#allocation0]]
  $region26: #{ntxent_loss.1} parent=0
    _
  %s7 = ssub.s32 1, %s5
  %s8 = scalar_select 0, %s7, %s5
  // Predicated region
  $region2: #{ntxent_loss.1} parent=0 // pred_check
    _
  $region3: #{ntxent_loss.1} parent=0 // pred_check_branch
    %10 = sbr.rel (0) target = $region5
  $region4: #{ntxent_loss.1} parent=0 // pred_region
    _
  $region5: #{ntxent_loss.1} parent=0 // pred_fallthru
    _
  // Predicated region
  $region6: #{ntxent_loss.1} parent=0 // pred_check
    _
  $region7: #{ntxent_loss.1} parent=0 // pred_check_branch
    %12 = sbr.rel (0) target = $region9
  $region8: #{ntxent_loss.1} parent=0 // pred_region
    _
  $region9: #{ntxent_loss.1} parent=0 // pred_fallthru
    _
  // Predicated region
  $region10: #{ntxent_loss.1} parent=0 // pred_check
    _
  $region11: #{ntxent_loss.1} parent=0 // pred_check_branch
    %14 = sbr.rel (0) target = $region13
  $region12: #{ntxent_loss.1} parent=0 // pred_region
    _
  $region13: #{ntxent_loss.1} parent=0 // pred_fallthru
    _
  // Predicated region
  $region14: #{ntxent_loss.1} parent=0 // pred_check
    _
  $region15: #{ntxent_loss.1} parent=0 // pred_check_branch
    %16 = sbr.rel (0) target = $region17
  $region16: #{ntxent_loss.1} parent=0 // pred_region
    _
  $region17: #{ntxent_loss.1} parent=0 // pred_fallthru
    _
  %v18 = vld [vmem:[%s0] sm:$0xff]
  %v19 = vld [vmem:[%s1] sm:$0xff]
  %v20 = vld [vmem:[%s2] sm:$0xf]
  %v21 = vld [vmem:[%s2 + $0x4] sm:$0xf]
  %v22 = vld [vmem:[%s2 + $0x8] sm:$0xf]
  %v23 = vld [vmem:[%s2 + $0xc] sm:$0xf]
  %v24 = vld [vmem:[%s2 + $0x10] sm:$0x1]
  %v25 = vpack.c.bf16 %v19, %v18
  %v26 = vunpack.c.l.bf16 %v24
  %v27 = vlaneseq
  %v28 = vshrl.u32 %v27, 7
  %v29 = vsub.s32 0, %v28
  %v30 = vrot.slane %v26, %v29
  %v35 = vunpack.c.l.b16 %v20
  %v36 = vunpack.c.l.b16 %v21
  %v37 = vunpack.c.l.b16 %v22
  %v38 = vunpack.c.l.b16 %v23
  %v39 = vpack.c.b16 %v36, %v35
  %v40 = vpack.c.b16 %v38, %v37
  %vm43 = vcmask 261120
  %v45 = vsel %vm43, %v25, 0
  %47 = vmatprep.subr.bf16.mxu0 0
  %48 = vmatpush1.bf16.msra.mxu0 %v39
  %49 = vmatprep.subr.bf16.mxu0 0
  %50 = vmatpush1.bf16.msra.mxu0 %v40
  %51 = vmatprep.subr.bf16.mxu0 0
  %52 = vmatpush1.bf16.msra.mxu0 0
  %53 = vmatprep.subr.bf16.mxu0 0
  %54 = vmatpush1.bf16.msra.mxu0 0
  %55 = vmatprep.subr.bf16.mxu0 0
  %56 = vmatpush1.bf16.msra.mxu0 0
  %57 = vmatprep.subr.bf16.mxu0 0
  %58 = vmatpush1.bf16.msra.mxu0 0
  %59 = vmatprep.subr.bf16.mxu0 0
  %60 = vmatpush1.bf16.msra.mxu0 0
  %61 = vmatprep.subr.bf16.mxu0 0
  %62 = vmatpush1.bf16.msra.mxu0 0
  %63 = vmatprep.subr.bf16.mxu0 0
  %64 = vmatpush1.bf16.msra.mxu0 0
  %65 = vmatprep.subr.bf16.mxu0 0
  %66 = vmatpush1.bf16.msra.mxu0 0
  %67 = vmatprep.subr.bf16.mxu0 0
  %68 = vmatpush1.bf16.msra.mxu0 0
  %69 = vmatprep.subr.bf16.mxu0 0
  %70 = vmatpush1.bf16.msra.mxu0 0
  %71 = vmatprep.subr.bf16.mxu0 0
  %72 = vmatpush1.bf16.msra.mxu0 0
  %73 = vmatprep.subr.bf16.mxu0 0
  %74 = vmatpush1.bf16.msra.mxu0 0
  %75 = vmatprep.subr.bf16.mxu0 0
  %76 = vmatpush1.bf16.msra.mxu0 0
  %77 = vmatprep.subr.bf16.mxu0 0
  %78 = vmatpush1.bf16.msra.mxu0 0
  %79 = vmatprep.mubr.bf16.mxu0 0
  %80 = vmatmul.mubr.bf16.gmra.mrb[0].mxu0 %v45
  %v81 = vpop.f32.mrb[0].mxu0
  %v82 = vadd.f32 %v30, %v81
  %v83 = vpop.f32.mrb[0].mxu0
  %v84 = vpop.f32.mrb[0].mxu0
  %v85 = vadd.f32 %v30, %v84
  %v86 = vpop.f32.mrb[0].mxu0
  %87 = vdwg.mxu0
  %v88 = vmul.f32 %v82, 0.5
  %v89 = vmul.f32 %v85, 0.5
  %v90 = vmul.f32 %v82, 0.70710677
  %v91 = vmul.f32 %v85, 0.70710677
  %v92 = vand.u32 2147483647, %v90
  %v93 = vand.u32 2147483647, %v91
  %v94 = vmul.f32 %v92, 0.3275911
  %v95 = vmul.f32 %v93, 0.3275911
  %v96 = vadd.f32 %v94, 1.0
  %v97 = vadd.f32 %v95, 1.0
  %v98 = vrcp.pop %v96
  %v99 = vmul.f32 1.0, %v98
  %v100 = vrcp.pop %v97
  %v101 = vmul.f32 1.0, %v100
  %v102 = vmul.f32 %v99, 1.0614054
  %v103 = vmul.f32 %v101, 1.0614054
  %v104 = vadd.f32 %v102, -1.4531521
  %v105 = vadd.f32 %v103, -1.4531521
  %v106 = vmul.f32 %v104, %v99
  %v107 = vmul.f32 %v105, %v101
  %v108 = vadd.f32 %v106, 1.4214138
  %v109 = vadd.f32 %v107, 1.4214138
  %v110 = vmul.f32 %v108, %v99
  %v111 = vmul.f32 %v109, %v101
  %v112 = vadd.f32 %v110, -0.28449672
  %v113 = vadd.f32 %v111, -0.28449672
  %v114 = vmul.f32 %v112, %v99
  %v115 = vmul.f32 %v113, %v101
  %v116 = vadd.f32 %v114, 0.2548296
  %v117 = vadd.f32 %v115, 0.2548296
  %v118 = vmul.f32 %v116, %v99
  %v119 = vmul.f32 %v117, %v101
  %v120 = vsub.f32 0.0, %v92
  %v121 = vsub.f32 0.0, %v93
  %v122 = vmul.f32 %v120, %v92
  %v123 = vmul.f32 %v121, %v93
  %v124 = vmul.f32 %v122, 1.442695
  %v125 = vpow.pop %v124
  %v126 = vmul.f32 %v123, 1.442695
  %v127 = vpow.pop %v126
  %v128 = vmul.f32 %v118, %v125
  %v129 = vmul.f32 %v119, %v127
  %v130 = vsub.f32 1.0, %v128
  %v131 = vsub.f32 1.0, %v129
  %vm132 = vcmp.lt.f32.partialorder %v90, 0.0
  %vm133 = vcmp.lt.f32.partialorder %v91, 0.0
  %v134 = vsub.f32 0.0, %v130
  %v135 = vsub.f32 0.0, %v131
  %v136 = vsel %vm132, %v134, %v130
  %v137 = vsel %vm133, %v135, %v131
  %v138 = vadd.f32 %v136, 1.0
  %v139 = vadd.f32 %v137, 1.0
  %v140 = vmul.f32 %v88, %v138
  %v141 = vmul.f32 %v89, %v139
  %v142 = vld [vmem:[%s3] sm:$0xf]
  %v143 = vld [vmem:[%s3 + $0x4] sm:$0x1]
  %v144 = vpack.c.bf16 %v141, %v140
  %v145 = vunpack.c.l.bf16 %v143
  %v146 = vlaneseq
  %v147 = vshrl.u32 %v146, 7
  %v148 = vsub.s32 0, %v147
  %v149 = vrot.slane %v145, %v148
  %vm150 = vcmask 64512
  %v152 = vsel %vm150, %v144, 0
  %vm154 = vcmask 1043456
  %v156 = vsel %vm154, %v142, 0
  %158 = vmatprep.subr.bf16.mxu0 0
  %159 = vmatpush1.bf16.msra.mxu0 %v156
  %160 = vmatprep.subr.bf16.mxu0 0
  %161 = vmatpush1.bf16.msra.mxu0 0
  %162 = vmatprep.subr.bf16.mxu0 0
  %163 = vmatpush1.bf16.msra.mxu0 0
  %164 = vmatprep.subr.bf16.mxu0 0
  %165 = vmatpush1.bf16.msra.mxu0 0
  %166 = vmatprep.subr.bf16.mxu0 0
  %167 = vmatpush1.bf16.msra.mxu0 0
  %168 = vmatprep.subr.bf16.mxu0 0
  %169 = vmatpush1.bf16.msra.mxu0 0
  %170 = vmatprep.subr.bf16.mxu0 0
  %171 = vmatpush1.bf16.msra.mxu0 0
  %172 = vmatprep.subr.bf16.mxu0 0
  %173 = vmatpush1.bf16.msra.mxu0 0
  %174 = vmatprep.subr.bf16.mxu0 0
  %175 = vmatpush1.bf16.msra.mxu0 0
  %176 = vmatprep.subr.bf16.mxu0 0
  %177 = vmatpush1.bf16.msra.mxu0 0
  %178 = vmatprep.subr.bf16.mxu0 0
  %179 = vmatpush1.bf16.msra.mxu0 0
  %180 = vmatprep.subr.bf16.mxu0 0
  %181 = vmatpush1.bf16.msra.mxu0 0
  %182 = vmatprep.subr.bf16.mxu0 0
  %183 = vmatpush1.bf16.msra.mxu0 0
  %184 = vmatprep.subr.bf16.mxu0 0
  %185 = vmatpush1.bf16.msra.mxu0 0
  %186 = vmatprep.subr.bf16.mxu0 0
  %187 = vmatpush1.bf16.msra.mxu0 0
  %188 = vmatprep.subr.bf16.mxu0 0
  %189 = vmatpush1.bf16.msra.mxu0 0
  %190 = vmatprep.mubr.bf16.mxu0 0
  %191 = vmatmul.mubr.bf16.gmra.mrb[0].mxu0 %v152
  %v192 = vpop.f32.mrb[0].mxu0
  %v193 = vadd.f32 %v149, %v192
  %v194 = vpop.f32.mrb[0].mxu0
  %v195 = vpop.f32.mrb[0].mxu0
  %v196 = vadd.f32 %v149, %v195
  %v197 = vpop.f32.mrb[0].mxu0
  %198 = vdwg.mxu0
  %v199 = vmul.f32 %v193, %v193
  %v200 = vmul.f32 %v196, %v196
  %vm201 = vcmask 31744
  %v202 = vsel %vm201, %v199, 0.0
  %203 = vadd.xlane.f32.xlu0 %v202
  %v204 = vpop.xlane.xlu0 %203
  %v205 = vsel %vm201, %v200, 0.0
  %206 = vadd.xlane.f32.xlu0 %v205
  %v207 = vpop.xlane.xlu0 %206
  %v208 = vrsqrt.pop %v204
  %v209 = vmul.f32 %v204, %v208
  %vm210 = vcmp.eq.f32.partialorder %v204, inf
  %v211 = vsel %vm210, %v204, %v209
  %vm212 = vcmp.eq.f32.partialorder %v204, 0.0
  %v213 = vand.u32 %v204, 2147483648
  %v214 = vsel %vm212, %v213, %v211
  %v215 = vrsqrt.pop %v207
  %v216 = vmul.f32 %v207, %v215
  %vm217 = vcmp.eq.f32.partialorder %v207, inf
  %v218 = vsel %vm217, %v207, %v216
  %vm219 = vcmp.eq.f32.partialorder %v207, 0.0
  %v220 = vand.u32 %v207, 2147483648
  %v221 = vsel %vm219, %v220, %v218
  %v222 = vmax.f32 %v214, 1e-12
  %v223 = vmax.f32 %v221, 1e-12
  %v224 = vrcp.pop %v222
  %v225 = vmul.f32 %v193, %v224
  %v226 = vrcp.pop %v223
  %v227 = vmul.f32 %v196, %v226
  %v228 = vmul.f32 %v225, %v227
  %v229 = vsel %vm201, %v228, 0.0
  %230 = vadd.xlane.f32.xlu0 %v229
  %v231 = vpop.xlane.xlu0 %230
  %v232 = vmul.f32 %v231, 2.0
  %v234 = vsel %vm201, %v225, 0
  %v237 = vsel %vm201, %v227, 0
  %239 = vmatprep.subr.mxu0 0.0
  %240 = vmatpush1.xpose.msra.mxu0 %v237
  %241 = vmatprep.subr.mxu0 0.0
  %242 = vmatpush1.xpose.msra.mxu0 0.0
  %243 = vmatprep.subr.mxu0 0.0
  %244 = vmatpush1.xpose.msra.mxu0 0.0
  %245 = vmatprep.subr.mxu0 0.0
  %246 = vmatpush1.xpose.msra.mxu0 0.0
  %247 = vmatprep.subr.mxu0 0.0
  %248 = vmatpush1.xpose.msra.mxu0 0.0
  %249 = vmatprep.subr.mxu0 0.0
  %250 = vmatpush1.xpose.msra.mxu0 0.0
  %251 = vmatprep.subr.mxu0 0.0
  %252 = vmatpush1.xpose.msra.mxu0 0.0
  %253 = vmatprep.subr.mxu0 0.0
  %254 = vmatpush1.xpose.msra.mxu0 0.0
  %255 = vmatprep.subr.mxu0 0.0
  %256 = vmatpush1.xpose.msra.mxu0 0.0
  %257 = vmatprep.subr.mxu0 0.0
  %258 = vmatpush1.xpose.msra.mxu0 0.0
  %259 = vmatprep.subr.mxu0 0.0
  %260 = vmatpush1.xpose.msra.mxu0 0.0
  %261 = vmatprep.subr.mxu0 0.0
  %262 = vmatpush1.xpose.msra.mxu0 0.0
  %263 = vmatprep.subr.mxu0 0.0
  %264 = vmatpush1.xpose.msra.mxu0 0.0
  %265 = vmatprep.subr.mxu0 0.0
  %266 = vmatpush1.xpose.msra.mxu0 0.0
  %267 = vmatprep.subr.mxu0 0.0
  %268 = vmatpush1.xpose.msra.mxu0 0.0
  %269 = vmatprep.subr.mxu0 0.0
  %270 = vmatpush1.xpose.msra.mxu0 0.0
  %271 = vmatprep.subr.mxu0 0.0
  %272 = vmatpush1.xpose.msra.mxu0 0.0
  %273 = vmatprep.subr.mxu0 0.0
  %274 = vmatpush1.xpose.msra.mxu0 0.0
  %275 = vmatprep.subr.mxu0 0.0
  %276 = vmatpush1.xpose.msra.mxu0 0.0
  %277 = vmatprep.subr.mxu0 0.0
  %278 = vmatpush1.xpose.msra.mxu0 0.0
  %279 = vmatprep.subr.mxu0 0.0
  %280 = vmatpush1.xpose.msra.mxu0 0.0
  %281 = vmatprep.subr.mxu0 0.0
  %282 = vmatpush1.xpose.msra.mxu0 0.0
  %283 = vmatprep.subr.mxu0 0.0
  %284 = vmatpush1.xpose.msra.mxu0 0.0
  %285 = vmatprep.subr.mxu0 0.0
  %286 = vmatpush1.xpose.msra.mxu0 0.0
  %287 = vmatprep.subr.mxu0 0.0
  %288 = vmatpush1.xpose.msra.mxu0 0.0
  %289 = vmatprep.subr.mxu0 0.0
  %290 = vmatpush1.xpose.msra.mxu0 0.0
  %291 = vmatprep.subr.mxu0 0.0
  %292 = vmatpush1.xpose.msra.mxu0 0.0
  %293 = vmatprep.subr.mxu0 0.0
  %294 = vmatpush1.xpose.msra.mxu0 0.0
  %295 = vmatprep.subr.mxu0 0.0
  %296 = vmatpush1.xpose.msra.mxu0 0.0
  %297 = vmatprep.subr.mxu0 0.0
  %298 = vmatpush1.xpose.msra.mxu0 0.0
  %299 = vmatprep.subr.mxu0 0.0
  %300 = vmatpush1.xpose.msra.mxu0 0.0
  %301 = vmatprep.subr.mxu0 0.0
  %302 = vmatpush1.xpose.msra.mxu0 0.0
  %303 = vmatprep.mubr.f32.mxu0 0.0
  %304 = vmatmul.mubr.f32.gmra.mrb[0].mxu0 %v234
  %v305 = vpop.f32.mrb[0].mxu0
  %v306 = vadd.f32 0.0, %v305
  %v307 = vpop.f32.mrb[0].mxu0
  %308 = vdwg.mxu0
  %v309 = vlaneseq
  %v310 = vshrl.u32 %v309, 7
  %v311 = vlaneseq
  %v312 = vand.u32 %v311, 127
  %vm313 = vcmp.eq.s32.totalorder %v310, %v312
  %v314 = vmul.f32 %v306, 2.0
  %v315 = vmul.f32 %v314, 1.442695
  %v316 = vpow.pop %v315
  %v317 = vsel %vm313, 0.0, %v316
  %v318 = vsel %vm150, %v317, 0.0
  %319 = vadd.xlane.f32.xlu0 %v318
  %v320 = vpop.xlane.xlu0 %319
  %v321 = vsel %vm313, %v232, 0.0
  %v322 = vsel %vm150, %v321, 0.0
  %v323 = vrot.slane %v322, 4
  %v324 = vadd.f32 %v322, %v323
  %v325 = vrot.slane %v324, 2
  %v326 = vadd.f32 %v324, %v325
  %v327 = vrot.slane %v326, 1
  %v328 = vadd.f32 %v326, %v327
  %v329 = vmul.f32 %v328, 1.442695
  %v330 = vpow.pop %v329
  %v331 = vadd.f32 %v330, %v320
  %v332 = vlog2.pop %v331
  %v333 = vmul.f32 %v332, 0.6931472
  %v334 = vsub.f32 %v333, %v328
  %v335 = vsel %vm150, %v334, 0.0
  %336 = vadd.xlane.f32.xlu0 %v335
  %v337 = vpop.xlane.xlu0 %336
  %v338 = vrot.slane %v337, 4
  %v339 = vadd.f32 %v337, %v338
  %v340 = vrot.slane %v339, 2
  %v341 = vadd.f32 %v339, %v340
  %v342 = vrot.slane %v341, 1
  %v343 = vadd.f32 %v341, %v342
  %s344 = vtos %v343
  %s345 = smul.f32 %s344, 0.125
  %v346 = vstv %s345
  %347 = vst [vmem:[%s4] sm:$0xff] %v346
  // Predicated region
  $region18: #{ntxent_loss.1} parent=0 // pred_check
    _
  $region19: #{ntxent_loss.1} parent=0 // pred_check_branch
    %349 = sbr.rel (0) target = $region21
  $region20: #{ntxent_loss.1} parent=0 // pred_region
    _
  $region21: #{ntxent_loss.1} parent=0 // pred_fallthru
    _
  // Predicated region
  $region22: #{ntxent_loss.1} parent=0 // pred_check
    _
  $region23: #{ntxent_loss.1} parent=0 // pred_check_branch
    %351 = sbr.rel (0) target = $region25
  $region24: #{ntxent_loss.1} parent=0 // pred_region
    _
  $region25: #{ntxent_loss.1} parent=0 // pred_fallthru
    _

</llo_original>
